<compile_context>
chip_gen: v5e
topology: v5e:2x2
jax: 0.10.0
libtpu: 0.0.40
codegen_flags: <defaults>
</compile_context>

<pallas_src>
import functools

import jax
import jax.numpy as jnp
from jax import lax
from jax.experimental import pallas as pl
from jax.experimental.pallas import tpu as pltpu


# --------------------------------------------------------------------------------------
# Kernel helpers
# --------------------------------------------------------------------------------------
def _token_type_emb(tt_col, tt_tab_ref, vt):
    """Tiny-vocab token_type gather as VPU selects (no one-hot, no MXU).

    NOTE: out-of-range ids map to row 0 (vt==2 branch) / zero (general branch); PyTorch's
    nn.Embedding would index OOB instead.  Harmless for valid BERT inputs.
    """
    if vt == 2:
        row0 = tt_tab_ref[pl.ds(0, 1), :].astype(jnp.float32)   # (1, H)
        row1 = tt_tab_ref[pl.ds(1, 1), :].astype(jnp.float32)   # (1, H)
        return jnp.where(tt_col == 1, row1, row0)               # (TR, H)
    acc = jnp.zeros((tt_col.shape[0], tt_tab_ref.shape[1]), jnp.float32)
    for v in range(vt):
        row = tt_tab_ref[pl.ds(v, 1), :].astype(jnp.float32)
        acc = acc + jnp.where(tt_col == v, row, jnp.float32(0.0))
    return acc


def _layernorm(emb, gamma_ref, beta_ref, eps):
    """LayerNorm over the hidden (lane) axis; gamma folded into the rsqrt scale."""
    mean = jnp.mean(emb, axis=-1, keepdims=True)
    centered = emb - mean
    var = jnp.mean(centered * centered, axis=-1, keepdims=True)
    scale = gamma_ref[...].astype(jnp.float32) * lax.rsqrt(var + eps)   # (1,H)*(TR,1)->(TR,H)
    return centered * scale + beta_ref[...].astype(jnp.float32)


# --------------------------------------------------------------------------------------
# Kernels
# --------------------------------------------------------------------------------------
def bert_embed_fast_kernel(x_ref, tt_ref, tt_tab_ref, pos_tile_ref,
                           gamma_ref, beta_ref, out_ref, *, eps, vt):
    """Contiguous position_ids: the (TILE_R, H) position-table slice is delivered by the
    BlockSpec index_map (no one-hot, no MXU). One grid step = one (TILE_R, H) row tile."""
    x = x_ref[...].astype(jnp.float32)                       # (TR, H)
    tt_col = tt_ref[...]                                     # (TR, 1) int32
    emb = x + _token_type_emb(tt_col, tt_tab_ref, vt) \
            + pos_tile_ref[...].astype(jnp.float32)
    # Dropout: eval-mode identity.
    out_ref[...] = _layernorm(emb, gamma_ref, beta_ref, eps).astype(out_ref.dtype)


def bert_embed_general_kernel(x_ref, ids_ref, tt_tab_ref, pos_tab_ref,
                              gamma_ref, beta_ref, out_ref, *, eps, vt):
    """Arbitrary position_ids: lane-aligned one-hot gather on the MXU, run in bf16
    (one-hot 0/1 exact in bf16, table pre-cast once in the wrapper, accumulate in f32)."""
    TR, H = x_ref.shape
    Vp = pos_tab_ref.shape[0]

    x = x_ref[...].astype(jnp.float32)                       # (TR, H)
    ids = ids_ref[...]                                       # (TR, 2) int32
    tt_col = ids[:, 0:1]
    pos_col = ids[:, 1:2]

    # one-hot is (TR, Vp) with Vp on the lane axis -> (TR,Vp)@(Vp,H) needs no transpose.
    pos_onehot = (pos_col == lax.broadcasted_iota(jnp.int32, (TR, Vp), 1)
                  ).astype(jnp.bfloat16)
    pos_emb = jnp.dot(pos_onehot, pos_tab_ref[...],
                      preferred_element_type=jnp.float32)    # (TR, H) f32

    emb = x + _token_type_emb(tt_col, tt_tab_ref, vt) + pos_emb
    # Dropout: eval-mode identity.
    out_ref[...] = _layernorm(emb, gamma_ref, beta_ref, eps).astype(out_ref.dtype)


# --------------------------------------------------------------------------------------
# Wrapper
# --------------------------------------------------------------------------------------
def _vmem_limit_bytes(tr, H, Vt, Vp, itemsize, general):
    need = 2 * 2 * tr * H * itemsize          # x in + out, double-buffered
    need += 2 * tr * 2 * 4                    # ids, double-buffered
    need += Vt * H * 4                        # token-type table (resident)
    need += 2 * H * 4                         # gamma / beta
    need += 8 * tr * H * 4                    # f32 intermediates headroom
    if general:
        need += Vp * H * 2                    # bf16 position table (resident)
        need += 2 * tr * Vp * 2               # one-hot temporaries
    else:
        need += 2 * tr * H * itemsize         # position-table tile, double-buffered
    # NOTE(v7x): physical VMEM is 64 MiB; cap there and keep tile_r <= 512 on that gen.
    return int(min(max(32 << 20, int(1.5 * need)), 64 << 20))


def _cost_estimate(R, H, Vp, itemsize, general):
    ln_flops = 10 * R * H                     # add / sub / mul / reductions
    bytes_accessed = 2 * R * H * itemsize + R * 8 + 2 * H * 4
    if general:
        flops = ln_flops + 2 * R * Vp * H     # one-hot matmul
        bytes_accessed += Vp * H * 2
    else:
        flops = ln_flops + 2 * R * H
        bytes_accessed += R * H * itemsize    # streamed position-table tiles (upper bound)
    return pl.CostEstimate(flops=int(flops), transcendentals=int(R),
                           bytes_accessed=int(bytes_accessed))


def bert_embeddings(inputs_embeds, token_type_ids=None, position_ids=None,
                    tt_table=None, pos_table=None, gamma=None, beta=None,
                    eps=1e-12, tile_r=512):
    """BertEmbeddings forward (inputs_embeds path). Returns (B, S, H).

    position_ids=None  -> contiguous positions 0..S-1 (the PyTorch default) -> fast path.
    position_ids given -> general bf16 one-hot MXU gather path.
    """
    B, S, H = inputs_embeds.shape
    Vt = tt_table.shape[0]
    Vp = pos_table.shape[0]
    assert H % 128 == 0, "hidden size must be a multiple of 128 (true for BERT sizes)"
    assert Vp >= S, "max_position_embeddings must cover the sequence length"

    x_dtype = inputs_embeds.dtype
    itemsize = jnp.dtype(x_dtype).itemsize
    sublane = 16 if x_dtype == jnp.bfloat16 else 8

    if token_type_ids is None:
        token_type_ids = jnp.zeros((B, S), dtype=jnp.int32)

    R = B * S
    x = inputs_embeds.reshape(R, H)
    tt = token_type_ids.reshape(R).astype(jnp.int32)
    gamma2 = gamma.reshape(1, H)
    beta2 = beta.reshape(1, H)

    use_fast = position_ids is None
    if use_fast:
        # Pick tile_r: a divisor of S, multiple of the sublane count, <= requested tile_r,
        # preferring a choice that leaves >= 2 grid steps (keeps both v7x TCs busy).
        divisors = [d for d in range(sublane, min(tile_r, S) + 1, sublane) if S % d == 0]
        if divisors:
            multi = [d for d in divisors if R // d >= 2]
            tr = max(multi) if multi else max(divisors)
        else:
            use_fast = False
            position_ids = jnp.broadcast_to(jnp.arange(S, dtype=jnp.int32), (B, S))

    if use_fast:
        assert tr % sublane == 0 and S % tr == 0
        n_tiles = R // tr                 # tr | S  =>  tr | B*S, no row padding needed
        n_pos_blocks = S // tr
        tt_col = tt[:, None]              # (R, 1)

        kernel = functools.partial(bert_embed_fast_kernel, eps=eps, vt=Vt)
        out = pl.pallas_call(
            kernel,
            out_shape=jax.ShapeDtypeStruct((R, H), x_dtype),
            grid_spec=pltpu.PrefetchScalarGridSpec(
                num_scalar_prefetch=0,
                grid=(n_tiles,),
                in_specs=[
                    pl.BlockSpec((tr, H), lambda t: (t, 0)),                    # x rows
                    pl.BlockSpec((tr, 1), lambda t: (t, 0)),                    # token_type ids
                    pl.BlockSpec((Vt, H), lambda t: (0, 0)),                    # tt table (resident)
                    pl.BlockSpec((tr, H), lambda t: (t % n_pos_blocks, 0)),     # pos-table tile
                    pl.BlockSpec((1, H), lambda t: (0, 0)),                     # gamma
                    pl.BlockSpec((1, H), lambda t: (0, 0)),                     # beta
                ],
                out_specs=pl.BlockSpec((tr, H), lambda t: (t, 0)),
            ),
            compiler_params=pltpu.CompilerParams(
                dimension_semantics=("parallel",),
                vmem_limit_bytes=_vmem_limit_bytes(tr, H, Vt, Vp, itemsize, general=False)),
            cost_estimate=_cost_estimate(R, H, Vp, itemsize, general=False),
        )(x, tt_col, tt_table, pos_table, gamma2, beta2)
        return out.reshape(B, S, H)

    # ---------------- general path: arbitrary position_ids (bf16 one-hot MXU) -------------
    tr = max(sublane, (tile_r // sublane) * sublane)
    assert tr % sublane == 0
    n_tiles = pl.cdiv(R, tr)
    Rp = n_tiles * tr
    pad = Rp - R

    pos = position_ids.reshape(R).astype(jnp.int32)
    ids = jnp.stack([tt, pos], axis=-1)                       # (R, 2): one small DMA per step
    if pad:
        x = jnp.pad(x, ((0, pad), (0, 0)))
        ids = jnp.pad(ids, ((0, pad), (0, 0)))

    # Pre-cast the position table to bf16 ONCE (one-hot is exact in bf16; accumulate in f32).
    pos_table_bf16 = pos_table.astype(jnp.bfloat16)

    kernel = functools.partial(bert_embed_general_kernel, eps=eps, vt=Vt)
    out = pl.pallas_call(
        kernel,
        out_shape=jax.ShapeDtypeStruct((Rp, H), x_dtype),
        grid_spec=pltpu.PrefetchScalarGridSpec(
            num_scalar_prefetch=0,
            grid=(n_tiles,),
            in_specs=[
                pl.BlockSpec((tr, H), lambda t: (t, 0)),      # x rows
                pl.BlockSpec((tr, 2), lambda t: (t, 0)),      # packed (token_type, position) ids
                pl.BlockSpec((Vt, H), lambda t: (0, 0)),      # tt table (resident)
                pl.BlockSpec((Vp, H), lambda t: (0, 0)),      # bf16 position table (resident)
                pl.BlockSpec((1, H), lambda t: (0, 0)),       # gamma
                pl.BlockSpec((1, H), lambda t: (0, 0)),       # beta
            ],
            out_specs=pl.BlockSpec((tr, H), lambda t: (t, 0)),
        ),
        compiler_params=pltpu.CompilerParams(
            dimension_semantics=("parallel",),
            vmem_limit_bytes=_vmem_limit_bytes(tr, H, Vt, Vp, itemsize, general=True)),
        cost_estimate=_cost_estimate(Rp, H, Vp, itemsize, general=True),
    )(x, ids, tt_table, pos_table_bf16, gamma2, beta2)

    return out[:R].reshape(B, S, H)


# --------------------------------------------------------------------------------------
# Test
# --------------------------------------------------------------------------------------
if __name__ == "__main__":
    # Small config: batch=2, seq=48, hidden=128, max_position_embeddings=64, type_vocab_size=2.
    B, S, H = 2, 48, 128
    Vt, Vp = 2, 64
    eps = 1e-12

    key = jax.random.PRNGKey(0)
    k1, k2, k3, k4, k5 = jax.random.split(key, 5)

    inputs_embeds = jax.random.normal(k1, (B, S, H), dtype=jnp.float32)
    tt_table = 0.02 * jax.random.normal(k2, (Vt, H), dtype=jnp.float32)
    pos_table = 0.02 * jax.random.normal(k3, (Vp, H), dtype=jnp.float32)
    gamma = 1.0 + 0.05 * jax.random.normal(k4, (H,), dtype=jnp.float32)
    beta = 0.02 * jax.random.normal(k5, (H,), dtype=jnp.float32)

    token_type_ids = jnp.zeros((B, S), dtype=jnp.int32).at[1, S // 2:].set(1)

    def ref_fn(pos_ids):
        emb = inputs_embeds + tt_table[token_type_ids] + pos_table[pos_ids]
        mean = emb.mean(-1, keepdims=True)
        var = ((emb - mean) ** 2).mean(-1, keepdims=True)
        return (emb - mean) / jnp.sqrt(var + eps) * gamma + beta

    # --- Fast path: contiguous positions (position_ids=None, the PyTorch default). ---
    # Small tile_r so the test exercises several grid steps and the modular pos-table map.
    out_fast = bert_embeddings(inputs_embeds, token_type_ids, None,
                               tt_table, pos_table, gamma, beta, eps=eps, tile_r=16)
    out_fast = jax.block_until_ready(out_fast)
    pos_contig = jnp.broadcast_to(jnp.arange(S, dtype=jnp.int32), (B, S))
    ref_fast = ref_fn(pos_contig)
    assert out_fast.shape == (B, S, H) and out_fast.dtype == jnp.float32
    assert jnp.allclose(out_fast, ref_fast, atol=1e-3, rtol=1e-3), "fast-path mismatch"

    # --- General path: arbitrary (reversed) position_ids -> bf16 one-hot MXU gather. ---
    pos_rev = jnp.broadcast_to(jnp.arange(S - 1, -1, -1, dtype=jnp.int32), (B, S))
    out_gen = bert_embeddings(inputs_embeds, token_type_ids, pos_rev,
                              tt_table, pos_table, gamma, beta, eps=eps, tile_r=40)
    out_gen = jax.block_until_ready(out_gen)
    ref_gen = ref_fn(pos_rev)
    assert out_gen.shape == (B, S, H)
    assert jnp.allclose(out_gen, ref_gen, atol=3e-3, rtol=3e-3), "general-path mismatch"

    print("KERNEL_OK")
</pallas_src>

<mosaic_0001>
module attributes {stable_mosaic.version = 11 : i64} {
  func.func @bert_embed_fast_kernel(%arg0: i32, %arg1: memref<16x128xf32, #tpu.memory_space<vmem>>, %arg2: memref<16x1xi32, #tpu.memory_space<vmem>>, %arg3: memref<2x128xf32, #tpu.memory_space<vmem>>, %arg4: memref<16x128xf32, #tpu.memory_space<vmem>>, %arg5: memref<1x128xf32, #tpu.memory_space<vmem>>, %arg6: memref<1x128xf32, #tpu.memory_space<vmem>>, %arg7: memref<16x128xf32, #tpu.memory_space<vmem>>) attributes {dimension_semantics = [#tpu.dimension_semantics<parallel>], iteration_bounds = array<i64: 6>, scalar_prefetch = 0 : i64, scratch_operands = 0 : i64, tpu.core_type = #tpu.core_type<tc>, window_params = [{transform_indices = @transform_0, window_bounds = array<i64: 16, 128>}, {transform_indices = @transform_1, window_bounds = array<i64: 16, 1>}, {pipeline_mode = #tpu.pipeline_mode<synchronous>, transform_indices = @transform_2, window_bounds = array<i64: 2, 128>}, {transform_indices = @transform_3, window_bounds = array<i64: 16, 128>}, {pipeline_mode = #tpu.pipeline_mode<synchronous>, transform_indices = @transform_4, window_bounds = array<i64: 1, 128>}, {pipeline_mode = #tpu.pipeline_mode<synchronous>, transform_indices = @transform_5, window_bounds = array<i64: 1, 128>}, {transform_indices = @transform_6, window_bounds = array<i64: 16, 128>}]} {
    %c0 = arith.constant 0 : index
    %c0_0 = arith.constant 0 : index
    %0 = vector.load %arg1[%c0, %c0_0] : memref<16x128xf32, #tpu.memory_space<vmem>>, vector<16x128xf32>
    %c0_1 = arith.constant 0 : index
    %c0_2 = arith.constant 0 : index
    %1 = vector.load %arg2[%c0_1, %c0_2] : memref<16x1xi32, #tpu.memory_space<vmem>>, vector<16x1xi32>
    %c0_3 = arith.constant 0 : index
    %c0_4 = arith.constant 0 : index
    %2 = vector.load %arg3[%c0_3, %c0_4] : memref<2x128xf32, #tpu.memory_space<vmem>>, vector<1x128xf32>
    %c1 = arith.constant 1 : index
    %c0_5 = arith.constant 0 : index
    %3 = vector.load %arg3[%c1, %c0_5] : memref<2x128xf32, #tpu.memory_space<vmem>>, vector<1x128xf32>
    %c1_i32 = arith.constant 1 : i32
    %4 = vector.broadcast %c1_i32 : i32 to vector<16x1xi32>
    %5 = arith.cmpi eq, %1, %4 : vector<16x1xi32>
    %6 = vector.shape_cast %5 : vector<16x1xi1> to vector<16x1xi1>
    %7 = vector.broadcast %6 : vector<16x1xi1> to vector<16x128xi1>
    %8 = vector.shape_cast %3 : vector<1x128xf32> to vector<1x128xf32>
    %9 = vector.broadcast %8 : vector<1x128xf32> to vector<16x128xf32>
    %10 = vector.shape_cast %2 : vector<1x128xf32> to vector<1x128xf32>
    %11 = vector.broadcast %10 : vector<1x128xf32> to vector<16x128xf32>
    %12 = arith.select %7, %9, %11 : vector<16x128xi1>, vector<16x128xf32>
    %13 = arith.addf %0, %12 : vector<16x128xf32>
    %c0_6 = arith.constant 0 : index
    %c0_7 = arith.constant 0 : index
    %14 = vector.load %arg4[%c0_6, %c0_7] : memref<16x128xf32, #tpu.memory_space<vmem>>, vector<16x128xf32>
    %15 = arith.addf %13, %14 : vector<16x128xf32>
    %cst = arith.constant dense<0.000000e+00> : vector<16xf32>
    %16 = vector.multi_reduction <add>, %15, %cst [1] : vector<16x128xf32> to vector<16xf32>
    %17 = vector.shape_cast %16 : vector<16xf32> to vector<16x1xf32>
    %cst_8 = arith.constant 1.280000e+02 : f32
    %18 = vector.broadcast %cst_8 : f32 to vector<16x1xf32>
    %19 = arith.divf %17, %18 : vector<16x1xf32>
    %20 = vector.broadcast %19 : vector<16x1xf32> to vector<16x128xf32>
    %21 = arith.subf %15, %20 : vector<16x128xf32>
    %22 = arith.mulf %21, %21 : vector<16x128xf32>
    %cst_9 = arith.constant dense<0.000000e+00> : vector<16xf32>
    %23 = vector.multi_reduction <add>, %22, %cst_9 [1] : vector<16x128xf32> to vector<16xf32>
    %24 = vector.shape_cast %23 : vector<16xf32> to vector<16x1xf32>
    %cst_10 = arith.constant 1.280000e+02 : f32
    %25 = vector.broadcast %cst_10 : f32 to vector<16x1xf32>
    %26 = arith.divf %24, %25 : vector<16x1xf32>
    %c0_11 = arith.constant 0 : index
    %c0_12 = arith.constant 0 : index
    %27 = vector.load %arg5[%c0_11, %c0_12] : memref<1x128xf32, #tpu.memory_space<vmem>>, vector<1x128xf32>
    %cst_13 = arith.constant 9.99999996E-13 : f32
    %28 = vector.broadcast %cst_13 : f32 to vector<16x1xf32>
    %29 = arith.addf %26, %28 : vector<16x1xf32>
    %30 = math.rsqrt %29 : vector<16x1xf32>
    %31 = vector.broadcast %27 : vector<1x128xf32> to vector<16x128xf32>
    %32 = vector.broadcast %30 : vector<16x1xf32> to vector<16x128xf32>
    %33 = arith.mulf %31, %32 : vector<16x128xf32>
    %34 = arith.mulf %21, %33 : vector<16x128xf32>
    %c0_14 = arith.constant 0 : index
    %c0_15 = arith.constant 0 : index
    %35 = vector.load %arg6[%c0_14, %c0_15] : memref<1x128xf32, #tpu.memory_space<vmem>>, vector<1x128xf32>
    %36 = vector.broadcast %35 : vector<1x128xf32> to vector<16x128xf32>
    %37 = arith.addf %34, %36 : vector<16x128xf32>
    %c0_16 = arith.constant 0 : index
    %c0_17 = arith.constant 0 : index
    %38 = vector.load %arg7[%c0_16, %c0_17] : memref<16x128xf32, #tpu.memory_space<vmem>>, vector<16x128xf32>
    tpu.vector_store %arg7[%c0_16, %c0_17], %37 {strides = array<i32>} : memref<16x128xf32, #tpu.memory_space<vmem>>, vector<16x128xf32>,
    return
  }
  func.func @transform_0(%arg0: i32) -> (i32, i32) {
    %c0_i32 = arith.constant 0 : i32
    %c0_i32_0 = arith.constant 0 : i32
    return %arg0, %c0_i32 : i32, i32
  }
  func.func @transform_1(%arg0: i32) -> (i32, i32) {
    %c0_i32 = arith.constant 0 : i32
    %c0_i32_0 = arith.constant 0 : i32
    return %arg0, %c0_i32 : i32, i32
  }
  func.func @transform_2(%arg0: i32) -> (i32, i32) {
    %c0_i32 = arith.constant 0 : i32
    %c0_i32_0 = arith.constant 0 : i32
    %c0_i32_1 = arith.constant 0 : i32
    return %c0_i32, %c0_i32_0 : i32, i32
  }
  func.func @transform_3(%arg0: i32) -> (i32, i32) {
    %c3_i32 = arith.constant 3 : i32
    %c0_i32 = arith.constant 0 : i32
    %0 = arith.cmpi eq, %c3_i32, %c0_i32 : i32
    %c1_i32 = arith.constant 1 : i32
    %1 = arith.select %0, %c1_i32, %c3_i32 : i32
    %2 = arith.remsi %arg0, %1 : i32
    %c0_i32_0 = arith.constant 0 : i32
    %3 = arith.cmpi ne, %2, %c0_i32_0 : i32
    %c0_i32_1 = arith.constant 0 : i32
    %4 = arith.cmpi slt, %2, %c0_i32_1 : i32
    %c0_i32_2 = arith.constant 0 : i32
    %5 = arith.cmpi slt, %1, %c0_i32_2 : i32
    %6 = arith.xori %4, %5 : i1
    %7 = arith.andi %6, %3 : i1
    %8 = arith.addi %2, %1 : i32
    %9 = arith.select %7, %8, %2 : i32
    %c0_i32_3 = arith.constant 0 : i32
    %c0_i32_4 = arith.constant 0 : i32
    return %9, %c0_i32_3 : i32, i32
  }
  func.func @transform_4(%arg0: i32) -> (i32, i32) {
    %c0_i32 = arith.constant 0 : i32
    %c0_i32_0 = arith.constant 0 : i32
    %c0_i32_1 = arith.constant 0 : i32
    return %c0_i32, %c0_i32_0 : i32, i32
  }
  func.func @transform_5(%arg0: i32) -> (i32, i32) {
    %c0_i32 = arith.constant 0 : i32
    %c0_i32_0 = arith.constant 0 : i32
    %c0_i32_1 = arith.constant 0 : i32
    return %c0_i32, %c0_i32_0 : i32, i32
  }
  func.func @transform_6(%arg0: i32) -> (i32, i32) {
    %c0_i32 = arith.constant 0 : i32
    %c0_i32_0 = arith.constant 0 : i32
    return %arg0, %c0_i32 : i32, i32
  }
}

</mosaic_0001>

<llo_original>
// kernel: tpu_custom_call.1
$region0: #{tpu_custom_call.1}
  #allocation0 [shape = 'u32[]', space=smem, size = 0x4, offset = 0x4, fixed_abs, tag = 'smem constant byte address 0x4 - core index']
  #allocation1 [shape = 'u32[72,128]{1,0:T(1,128)}', space=vmem, size = 0x9000, scoped, tag = 'internal scratch']
  %s0 = inlined_call_operand.vmem [shape: f32[96,128], index: 0, kind: input, shape index: {}]
  %s1 = inlined_call_operand.vmem [shape: s32[96,1], index: 1, kind: input, shape index: {}]
  %s2 = inlined_call_operand.vmem [shape: f32[2,128], index: 2, kind: input, shape index: {}]
  %s3 = inlined_call_operand.hbm [shape: f32[64,128], index: 3, kind: input, shape index: {}]
  %s4 = inlined_call_operand.vmem [shape: f32[1,128], index: 4, kind: input, shape index: {}]
  %s5 = inlined_call_operand.vmem [shape: f32[1,128], index: 5, kind: input, shape index: {}]
  %s6 = inlined_call_operand.hbm [shape: f32[96,128], index: 6, kind: output, shape index: {}]
  %s7 = sld [smem:[#allocation0]]
  $region61: #{tpu_custom_call.1} parent=0
    _
  %s9 = ssub.s32 1, %s7
  %s10 = scalar_select 0, %s9, %s7
  $region1: #{tpu_custom_call.1} parent=0
    #allocation2 [shape = 'u8[16384]{0}', space=vmem, size = 0x4000, scoped, tag = 'input window, operand 3']
    #allocation3 [shape = 's32[2]{0}', space=sflag, size = 0x8, scoped, tag = 'scoped memory for tpu_custom_call.1']
    #allocation4 [shape = 's32[2]{0}', space=sflag, size = 0x8, scoped, tag = 'scoped memory for tpu_custom_call.1']
    #allocation5 [shape = 'u8[16384]{0}', space=vmem, size = 0x4000, scoped, tag = 'output window, operand 0']
    %11 = vsyncpa [#allocation3], 0
    %s12 = scalar_lea.sflag [#allocation3], 1
    %13 = vsyncpa %s12, 0
    %14 = vsyncpa [#allocation4], 0
    %s15 = scalar_lea.sflag [#allocation4], 1
    %16 = vsyncpa %s15, 0
    loop: start=0, step=1, limit=8
    $region2: #{tpu_custom_call.1} parent=1 // loop_pre_header
      _
    $region3: #{tpu_custom_call.1} parent=1 // loop_header
      %s18 = sphi 0, %s22
      %p19 = scmp.ge.s32.totalorder %s18, 8
      %s28 = sphi 0, %s30
      %s31 = sphi 0, %s28
      %s32 = sphi 0, %s31
      %s48 = sphi 0, %s32
      %s54 = sphi 0, %s56
      %s57 = sphi 0, %s54
      %s58 = sphi 0, %s57
      %s74 = sphi 0, %s58
      %s78 = sphi 0, %s78
      %s80 = sphi 0, %s78
      %s81 = sphi 0, %s80
      %s95 = sphi 0, %s81
      %s127 = sphi 0, %s129
      %s130 = sphi 0, %s127
      %s131 = sphi 0, %s130
      %s147 = sphi 0, %s131
      %s151 = sphi 0, %s151
      %s153 = sphi 0, %s151
      %s154 = sphi 0, %s153
      %s168 = sphi 0, %s154
      %s172 = sphi 0, %s172
      %s174 = sphi 0, %s172
      %s175 = sphi 0, %s174
      %s189 = sphi 0, %s175
      %s195 = sphi 0, %s197
      %s198 = sphi 0, %s195
      %s199 = sphi 0, %s198
      %s215 = sphi 0, %s199
    $region4: #{tpu_custom_call.1} parent=1 // loop_header_branch
      %21 = sbr.rel (%p19) target = $region8
    $region5: #{tpu_custom_call.1} parent=1 // loop_body
      %s23 = ssub.s32 %s18, 1
      %s24 = ssub.s32 %s18, 2
      %s25 = sadd.s32 %s18, 1
      %s26 = ssub.s32 %s18, %s25
      %p27 = scmp.eq.s32.totalorder %s26, 0
      %s29 = sadd.s32 %s28, 1
      %s30 = scalar_select %p27, %s28, %s29
      %p33 = pneg %p27
      %p34 = scmp.eq.s32.totalorder %s18, 5
      %p35 = por %p33, %p34
      %p36 = scmp.ne.s32.totalorder %s28, %s31
      %p37 = scmp.eq.s32.totalorder %s18, 0
      %p38 = por %p36, %p37
      %p39 = scmp.ne.s32.totalorder %s28, %s31
      %p40 = scmp.eq.s32.totalorder %s23, 5
      %p41 = por %p39, %p40
      %p42 = scmp.ne.s32.totalorder %s31, %s32
      %p43 = scmp.eq.s32.totalorder %s23, 0
      %p44 = por %p42, %p43
      %p45 = scmp.ne.s32.totalorder %s31, %s32
      %p46 = scmp.eq.s32.totalorder %s24, 5
      %p47 = por %p45, %p46
      %p49 = scmp.ne.s32.totalorder %s32, %s48
      %p50 = scmp.eq.s32.totalorder %s24, 0
      %p51 = por %p49, %p50
      %s52 = ssub.s32 %s18, %s25
      %p53 = scmp.eq.s32.totalorder %s52, 0
      %s55 = sadd.s32 %s54, 1
      %s56 = scalar_select %p53, %s54, %s55
      %p59 = pneg %p53
      %p60 = scmp.eq.s32.totalorder %s18, 5
      %p61 = por %p59, %p60
      %p62 = scmp.ne.s32.totalorder %s54, %s57
      %p63 = scmp.eq.s32.totalorder %s18, 0
      %p64 = por %p62, %p63
      %p65 = scmp.ne.s32.totalorder %s54, %s57
      %p66 = scmp.eq.s32.totalorder %s23, 5
      %p67 = por %p65, %p66
      %p68 = scmp.ne.s32.totalorder %s57, %s58
      %p69 = scmp.eq.s32.totalorder %s23, 0
      %p70 = por %p68, %p69
      %p71 = scmp.ne.s32.totalorder %s57, %s58
      %p72 = scmp.eq.s32.totalorder %s24, 5
      %p73 = por %p71, %p72
      %p75 = scmp.ne.s32.totalorder %s58, %s74
      %p76 = scmp.eq.s32.totalorder %s24, 0
      %p77 = por %p75, %p76
      %s79 = sadd.s32 %s78, 1
      %p82 = scmp.eq.s32.totalorder %s18, 5
      %p83 = scmp.ne.s32.totalorder %s78, %s80
      %p84 = scmp.eq.s32.totalorder %s18, 0
      %p85 = por %p83, %p84
      %p86 = scmp.ne.s32.totalorder %s78, %s80
      %p87 = scmp.eq.s32.totalorder %s23, 5
      %p88 = por %p86, %p87
      %p89 = scmp.ne.s32.totalorder %s80, %s81
      %p90 = scmp.eq.s32.totalorder %s23, 0
      %p91 = por %p89, %p90
      %p92 = scmp.ne.s32.totalorder %s80, %s81
      %p93 = scmp.eq.s32.totalorder %s24, 5
      %p94 = por %p92, %p93
      %p96 = scmp.ne.s32.totalorder %s81, %s95
      %p97 = scmp.eq.s32.totalorder %s24, 0
      %p98 = por %p96, %p97
      %p99 = scmp.lt.s32.totalorder %s18, 0
      %s100 = ssub.s32 0, %s18
      %s101 = scalar_select %p99, %s100, %s18
      %s102 = sdiv.u32.pop %s101, 3
      %s103 = srem.u32.pop %s101, 3
      %s104 = ssub.s32 0, %s103
      %s105 = scalar_select %p99, %s104, %s103
      %p106 = scmp.ne.s32.totalorder %s105, 0
      %p107 = scmp.lt.s32.totalorder %s105, 0
      %p108 = pnand %p107, %p106
      %p109 = pneg %p108
      %s110 = sadd.s32 %s105, 3
      %s111 = scalar_select %p109, %s110, %s105
      %p112 = scmp.lt.s32.totalorder %s25, 0
      %s113 = ssub.s32 0, %s25
      %s114 = scalar_select %p112, %s113, %s25
      %s115 = sdiv.u32.pop %s114, 3
      %s116 = srem.u32.pop %s114, 3
      %s117 = ssub.s32 0, %s116
      %s118 = scalar_select %p112, %s117, %s116
      %p119 = scmp.ne.s32.totalorder %s118, 0
      %p120 = scmp.lt.s32.totalorder %s118, 0
      %p121 = pnand %p120, %p119
      %p122 = pneg %p121
      %s123 = sadd.s32 %s118, 3
      %s124 = scalar_select %p122, %s123, %s118
      %s125 = ssub.s32 %s111, %s124
      %p126 = scmp.eq.s32.totalorder %s125, 0
      %s128 = sadd.s32 %s127, 1
      %s129 = scalar_select %p126, %s127, %s128
      %p132 = pneg %p126
      %p133 = scmp.eq.s32.totalorder %s18, 5
      %p134 = por %p132, %p133
      %p135 = scmp.ne.s32.totalorder %s127, %s130
      %p136 = scmp.eq.s32.totalorder %s18, 0
      %p137 = por %p135, %p136
      %p138 = scmp.ne.s32.totalorder %s127, %s130
      %p139 = scmp.eq.s32.totalorder %s23, 5
      %p140 = por %p138, %p139
      %p141 = scmp.ne.s32.totalorder %s130, %s131
      %p142 = scmp.eq.s32.totalorder %s23, 0
      %p143 = por %p141, %p142
      %p144 = scmp.ne.s32.totalorder %s130, %s131
      %p145 = scmp.eq.s32.totalorder %s24, 5
      %p146 = por %p144, %p145
      %p148 = scmp.ne.s32.totalorder %s131, %s147
      %p149 = scmp.eq.s32.totalorder %s24, 0
      %p150 = por %p148, %p149
      %s152 = sadd.s32 %s151, 1
      %p155 = scmp.eq.s32.totalorder %s18, 5
      %p156 = scmp.ne.s32.totalorder %s151, %s153
      %p157 = scmp.eq.s32.totalorder %s18, 0
      %p158 = por %p156, %p157
      %p159 = scmp.ne.s32.totalorder %s151, %s153
      %p160 = scmp.eq.s32.totalorder %s23, 5
      %p161 = por %p159, %p160
      %p162 = scmp.ne.s32.totalorder %s153, %s154
      %p163 = scmp.eq.s32.totalorder %s23, 0
      %p164 = por %p162, %p163
      %p165 = scmp.ne.s32.totalorder %s153, %s154
      %p166 = scmp.eq.s32.totalorder %s24, 5
      %p167 = por %p165, %p166
      %p169 = scmp.ne.s32.totalorder %s154, %s168
      %p170 = scmp.eq.s32.totalorder %s24, 0
      %p171 = por %p169, %p170
      %s173 = sadd.s32 %s172, 1
      %p176 = scmp.eq.s32.totalorder %s18, 5
      %p177 = scmp.ne.s32.totalorder %s172, %s174
      %p178 = scmp.eq.s32.totalorder %s18, 0
      %p179 = por %p177, %p178
      %p180 = scmp.ne.s32.totalorder %s172, %s174
      %p181 = scmp.eq.s32.totalorder %s23, 5
      %p182 = por %p180, %p181
      %p183 = scmp.ne.s32.totalorder %s174, %s175
      %p184 = scmp.eq.s32.totalorder %s23, 0
      %p185 = por %p183, %p184
      %p186 = scmp.ne.s32.totalorder %s174, %s175
      %p187 = scmp.eq.s32.totalorder %s24, 5
      %p188 = por %p186, %p187
      %p190 = scmp.ne.s32.totalorder %s175, %s189
      %p191 = scmp.eq.s32.totalorder %s24, 0
      %p192 = por %p190, %p191
      %s193 = ssub.s32 %s18, %s25
      %p194 = scmp.eq.s32.totalorder %s193, 0
      %s196 = sadd.s32 %s195, 1
      %s197 = scalar_select %p194, %s195, %s196
      %p200 = pneg %p194
      %p201 = scmp.eq.s32.totalorder %s18, 5
      %p202 = por %p200, %p201
      %p203 = scmp.ne.s32.totalorder %s195, %s198
      %p204 = scmp.eq.s32.totalorder %s18, 0
      %p205 = por %p203, %p204
      %p206 = scmp.ne.s32.totalorder %s195, %s198
      %p207 = scmp.eq.s32.totalorder %s23, 5
      %p208 = por %p206, %p207
      %p209 = scmp.ne.s32.totalorder %s198, %s199
      %p210 = scmp.eq.s32.totalorder %s23, 0
      %p211 = por %p209, %p210
      %p212 = scmp.ne.s32.totalorder %s198, %s199
      %p213 = scmp.eq.s32.totalorder %s24, 5
      %p214 = por %p212, %p213
      %p216 = scmp.ne.s32.totalorder %s199, %s215
      %p217 = scmp.eq.s32.totalorder %s24, 0
      %p218 = por %p216, %p217
      %p219 = scmp.le.s32.totalorder 1, %s18
      %p220 = scmp.lt.s32.totalorder %s18, 7
      %p221 = pnand %p219, %p220
      %p222 = pneg %p221
      // Predicated region
      $region9: #{tpu_custom_call.1} parent=5 // pred_check
        _
      $region10: #{tpu_custom_call.1} parent=5 // pred_check_branch
        %224 = sbr.rel (%p221) target = $region12
      $region11: #{tpu_custom_call.1} parent=5 // pred_region
        %s225 = ssub.s32 %s18, 1
        // Predicated region
        $region13: #{tpu_custom_call.1} parent=11 // pred_check
          %p226 = pneg %p91
        $region14: #{tpu_custom_call.1} parent=11 // pred_check_branch
          %228 = sbr.rel (%p226) target = $region16
        $region15: #{tpu_custom_call.1} parent=11 // pred_region
          _
        $region16: #{tpu_custom_call.1} parent=11 // pred_fallthru
          _
        // Predicated region
        $region17: #{tpu_custom_call.1} parent=11 // pred_check
          %p229 = pneg %p164
        $region18: #{tpu_custom_call.1} parent=11 // pred_check_branch
          %231 = sbr.rel (%p229) target = $region20
        $region19: #{tpu_custom_call.1} parent=11 // pred_region
          _
        $region20: #{tpu_custom_call.1} parent=11 // pred_fallthru
          _
        // Predicated region
        $region21: #{tpu_custom_call.1} parent=11 // pred_check
          %p232 = pneg %p185
        $region22: #{tpu_custom_call.1} parent=11 // pred_check_branch
          %234 = sbr.rel (%p232) target = $region24
        $region23: #{tpu_custom_call.1} parent=11 // pred_region
          _
        $region24: #{tpu_custom_call.1} parent=11 // pred_fallthru
          _
      $region12: #{tpu_custom_call.1} parent=5 // pred_fallthru
        _
      %p235 = scmp.lt.s32.totalorder %s18, 6
      // Predicated region
      $region25: #{tpu_custom_call.1} parent=5 // pred_check
        %p236 = pneg %p235
      $region26: #{tpu_custom_call.1} parent=5 // pred_check_branch
        %238 = sbr.rel (%p236) target = $region28
      $region27: #{tpu_custom_call.1} parent=5 // pred_region
        // Predicated region
        $region29: #{tpu_custom_call.1} parent=27 // pred_check
          %p239 = pneg %p38
        $region30: #{tpu_custom_call.1} parent=27 // pred_check_branch
          %241 = sbr.rel (%p239) target = $region32
        $region31: #{tpu_custom_call.1} parent=27 // pred_region
          %s242 = smul.u32 2, %s18
          %p243 = scmp.lt.s32.totalorder %s242, 11
          %s244 = scalar_select %p243, %s242, 11
          %s245 = smul.addr %s244, 8
          %s246 = scalar_lea.vmem %s0, %s245
          %s247 = smul.u32 2, %s18
        $region32: #{tpu_custom_call.1} parent=27 // pred_fallthru
          _
        // Predicated region
        $region33: #{tpu_custom_call.1} parent=27 // pred_check
          %p248 = pneg %p64
        $region34: #{tpu_custom_call.1} parent=27 // pred_check_branch
          %250 = sbr.rel (%p248) target = $region36
        $region35: #{tpu_custom_call.1} parent=27 // pred_region
          %s251 = smul.u32 2, %s18
          %p252 = scmp.lt.s32.totalorder %s251, 11
          %s253 = scalar_select %p252, %s251, 11
          %s254 = smul.addr %s253, 8
          %s255 = scalar_lea.vmem %s1, %s254
          %s256 = smul.u32 2, %s18
        $region36: #{tpu_custom_call.1} parent=27 // pred_fallthru
          _
        // Predicated region
        $region37: #{tpu_custom_call.1} parent=27 // pred_check
          %p257 = pneg %p137
        $region38: #{tpu_custom_call.1} parent=27 // pred_check_branch
          %259 = sbr.rel (%p257) target = $region40
        $region39: #{tpu_custom_call.1} parent=27 // pred_region
          %s260 = sand.u32 %s127, 1
          %s261 = scalar_lea.sflag [#allocation3], %s260
          %s262 = sand.u32 %s127, 1
          %s263 = smul.addr %s262, 16
          %s264 = scalar_lea.vmem [#allocation2], %s263
          %p265 = scmp.lt.s32.totalorder %s18, 0
          %s266 = ssub.s32 0, %s18
          %s267 = scalar_select %p265, %s266, %s18
          %s268 = sdiv.u32.pop %s267, 3
          %s269 = srem.u32.pop %s267, 3
          %s270 = ssub.s32 0, %s269
          %s271 = scalar_select %p265, %s270, %s269
          %p272 = scmp.ne.s32.totalorder %s271, 0
          %p273 = scmp.lt.s32.totalorder %s271, 0
          %p274 = pnand %p273, %p272
          %p275 = pneg %p274
          %s276 = sadd.s32 %s271, 3
          %s277 = scalar_select %p275, %s276, %s271
          %s278 = smul.u32 2, %s277
          %280 = vsyncadd %s261, 0
          %s281 = smul.addr %s278, 8
          %s282 = scalar_lea.hbm %s3, %s281
          %s283 = sshll.u32 %s282, 4
          %s284 = int_to_ptr.hbm [resolvable:$true] %s283
          %s285 = sshll.u32 %s264, 4
          %s286 = int_to_ptr.vmem [resolvable:$true] %s285
          %291 = dma.hbm_to_vmem [thread:$0]  %s284, 256, %s286, %s261, 128, 128, 8
        $region40: #{tpu_custom_call.1} parent=27 // pred_fallthru
          _
      $region28: #{tpu_custom_call.1} parent=5 // pred_fallthru
        _
      %p292 = scmp.le.s32.totalorder 1, %s18
      %p293 = scmp.lt.s32.totalorder %s18, 7
      %p294 = pnand %p292, %p293
      %p295 = pneg %p294
      // Predicated region
      $region41: #{tpu_custom_call.1} parent=5 // pred_check
        _
      $region42: #{tpu_custom_call.1} parent=5 // pred_check_branch
        %297 = sbr.rel (%p294) target = $region44
      $region43: #{tpu_custom_call.1} parent=5 // pred_region
        %s298 = ssub.s32 %s18, 1
        %s299 = sand.u32 %s130, 1
        %s300 = scalar_lea.sflag [#allocation3], %s299
        %s301 = sand.u32 %s130, 1
        %s302 = smul.addr %s301, 16
        %s303 = scalar_lea.vmem [#allocation2], %s302
        // Predicated region
        $region45: #{tpu_custom_call.1} parent=43 // pred_check
          %p304 = pneg %p143
        $region46: #{tpu_custom_call.1} parent=43 // pred_check_branch
          %306 = sbr.rel (%p304) target = $region48
        $region47: #{tpu_custom_call.1} parent=43 // pred_region
          %308 = dma.done %s300, 256
        $region48: #{tpu_custom_call.1} parent=43 // pred_fallthru
          _
        %s309 = smul.u32 2, %s23
        %p310 = scmp.lt.s32.totalorder %s309, 11
        %s311 = scalar_select %p310, %s309, 11
        %s312 = smul.addr %s311, 8
        %s313 = scalar_lea.vmem %s0, %s312
        %p314 = pneg %p44
        %p315 = pneg %p41
        %s316 = smul.u32 2, %s23
        %p317 = scmp.lt.s32.totalorder %s316, 11
        %s318 = scalar_select %p317, %s316, 11
        %s319 = smul.addr %s318, 8
        %s320 = scalar_lea.vmem %s1, %s319
        %p321 = pneg %p70
        %p322 = pneg %p67
        %p323 = pneg %p91
        %p324 = pneg %p88
        %s325 = sand.u32 %s130, 1
        %s326 = scalar_lea.sflag [#allocation3], %s325
        %s327 = sand.u32 %s130, 1
        %s328 = smul.addr %s327, 16
        %s329 = scalar_lea.vmem [#allocation2], %s328
        %p330 = pneg %p143
        %p331 = pneg %p140
        %p332 = pneg %p164
        %p333 = pneg %p161
        %p334 = pneg %p185
        %p335 = pneg %p182
        %p336 = pneg %p211
        %p337 = pneg %p208
        %s338 = sand.u32 %s198, 1
        %s339 = scalar_lea.sflag [#allocation4], %s338
        %s340 = sand.u32 %s198, 1
        %s341 = smul.addr %s340, 16
        %s342 = scalar_lea.vmem [#allocation5], %s341
        %s343 = smul.u32 2, %s23
        %p344 = scmp.lt.s32.totalorder %s343, 11
        %s345 = scalar_select %p344, %s343, 11
        %s346 = smul.addr %s345, 8
        %s347 = scalar_lea.vmem %s0, %s346
        %s348 = smul.u32 2, %s23
        %s349 = smul.u32 2, %s23
        %p350 = scmp.lt.s32.totalorder %s349, 11
        %s351 = scalar_select %p350, %s349, 11
        %s352 = smul.addr %s351, 8
        %s353 = scalar_lea.vmem %s1, %s352
        %s354 = smul.u32 2, %s23
        %p355 = scmp.lt.s32.totalorder %s23, 0
        %s356 = ssub.s32 0, %s23
        %s357 = scalar_select %p355, %s356, %s23
        %s358 = sdiv.u32.pop %s357, 3
        %s359 = srem.u32.pop %s357, 3
        %s360 = ssub.s32 0, %s359
        %s361 = scalar_select %p355, %s360, %s359
        %p362 = scmp.ne.s32.totalorder %s361, 0
        %p363 = scmp.lt.s32.totalorder %s361, 0
        %p364 = pnand %p363, %p362
        %p365 = pneg %p364
        %s366 = sadd.s32 %s361, 3
        %s367 = scalar_select %p365, %s366, %s361
        %s368 = smul.u32 2, %s367
        %s369 = smul.u32 2, %s23
        %v370 = vld [vmem:[%s347] sm:$0xff]
        %v371 = vld [vmem:[%s347 + $0x8] sm:$0xff]
        %v372 = vld [vmem:[%s353] sm:$0xff]
        %v373 = vld [vmem:[%s353 + $0x8] sm:$0xff]
        %v374 = vld [vmem:[%s2] sm:$0x1]
        %v375 = vld [vmem:[%s2 + $0x1] sm:$0x1]
        %vm376 = vcmp.eq.s32.totalorder %v372, 1
        %vm377 = vcmp.eq.s32.totalorder %v373, 1
        %v378 = vsel %vm376, 1, 0
        %v379 = vsel %vm377, 1, 0
        %380 = vset.pattern.permute.xlu0 0
        %381 = vperm.xlu0 %380, %v378
        %v382 = vpop.permute.xlu0 %381
        %383 = vset.pattern.permute.xlu0 0
        %384 = vperm.xlu0 %383, %v379
        %v385 = vpop.permute.xlu0 %384
        %vm386 = vcmp.eq.s32.totalorder %v382, 1
        %vm387 = vcmp.eq.s32.totalorder %v385, 1
        %v388 = vperm.slane %v375, 0
        %v389 = vperm.slane %v374, 0
        %v390 = vsel %vm386, %v388, %v389
        %v391 = vsel %vm387, %v388, %v389
        %v392 = vadd.f32 %v370, %v390
        %v393 = vadd.f32 %v371, %v391
        %v394 = vld [vmem:[%s303] sm:$0xff]
        %v395 = vld [vmem:[%s303 + $0x8] sm:$0xff]
        %v396 = vadd.f32 %v392, %v394
        %v397 = vadd.f32 %v393, %v395
        %398 = vadd.xlane.f32.xlu0 %v396
        %v399 = vpop.xlane.xlu0 %398
        %400 = vadd.xlane.f32.xlu0 %v397
        %v401 = vpop.xlane.xlu0 %400
        %v402 = vrcp.pop 128.0
        %v403 = vmul.f32 128.0, %v402
        %v404 = vsub.f32 1.0, %v403
        %v405 = vmul.f32 %v402, %v404
        %v406 = vadd.f32 %v402, %v405
        %vm407 = vweird.f32 %v402
        %v408 = vsel %vm407, %v402, %v406
        %v409 = vmul.f32 %v399, %v408
        %v410 = vmul.f32 %v401, %v408
        %v411 = vsub.f32 %v396, %v409
        %v412 = vsub.f32 %v397, %v410
        %v413 = vmul.f32 %v411, %v411
        %v414 = vmul.f32 %v412, %v412
        %415 = vadd.xlane.f32.xlu0 %v413
        %v416 = vpop.xlane.xlu0 %415
        %417 = vadd.xlane.f32.xlu0 %v414
        %v418 = vpop.xlane.xlu0 %417
        %v419 = vmul.f32 %v416, %v408
        %v420 = vmul.f32 %v418, %v408
        %v421 = vld [vmem:[%s4] sm:$0x1]
        %v422 = vadd.f32 %v419, 1e-12
        %v423 = vadd.f32 %v420, 1e-12
        %v424 = vrsqrt.pop %v422
        %v425 = vmul.f32 %v424, %v422
        %v426 = vmul.f32 %v425, %v424
        %v427 = vmul.f32 0.5, %v426
        %v428 = vsub.f32 1.5, %v427
        %v429 = vmul.f32 %v424, %v428
        %vm430 = vweird.f32 %v422
        %vm431 = vweird.f32 %v424
        %vm432 = vmor %vm430, %vm431
        %v433 = vsel %vm432, %v424, %v429
        %v434 = vrsqrt.pop %v423
        %v435 = vmul.f32 %v434, %v423
        %v436 = vmul.f32 %v435, %v434
        %v437 = vmul.f32 0.5, %v436
        %v438 = vsub.f32 1.5, %v437
        %v439 = vmul.f32 %v434, %v438
        %vm440 = vweird.f32 %v423
        %vm441 = vweird.f32 %v434
        %vm442 = vmor %vm440, %vm441
        %v443 = vsel %vm442, %v434, %v439
        %v445 = vperm.slane %v421, 0
        %v447 = vmul.f32 %v445, %v433
        %v448 = vmul.f32 %v445, %v443
        %v449 = vmul.f32 %v411, %v447
        %v450 = vmul.f32 %v412, %v448
        %v451 = vld [vmem:[%s5] sm:$0x1]
        %v453 = vperm.slane %v451, 0
        %v455 = vadd.f32 %v449, %v453
        %v456 = vadd.f32 %v450, %v453
        %457 = vst [vmem:[%s342] sm:$0xff] %v455
        %458 = vst [vmem:[%s342 + $0x8] sm:$0xff] %v456
        %s459 = sand.u32 %s198, 1
        %s460 = scalar_lea.sflag [#allocation4], %s459
        %s461 = sand.u32 %s198, 1
        %s462 = smul.addr %s461, 16
        %s463 = scalar_lea.vmem [#allocation5], %s462
        // Predicated region
        $region49: #{tpu_custom_call.1} parent=43 // pred_check
          %p464 = pneg %p208
        $region50: #{tpu_custom_call.1} parent=43 // pred_check_branch
          %466 = sbr.rel (%p464) target = $region52
        $region51: #{tpu_custom_call.1} parent=43 // pred_region
          %s467 = smul.u32 2, %s23
          %469 = vsyncadd %s460, 0
          %s470 = smul.addr %s467, 8
          %s471 = scalar_lea.hbm %s6, %s470
          %s472 = sshll.u32 %s463, 4
          %s473 = int_to_ptr.vmem [resolvable:$true] %s472
          %s474 = sshll.u32 %s471, 4
          %s475 = int_to_ptr.hbm [resolvable:$true] %s474
          %480 = dma.vmem_to_hbm [thread:$0]  %s473, 256, %s475, %s460, 128, 128, 8
        $region52: #{tpu_custom_call.1} parent=43 // pred_fallthru
          _
      $region44: #{tpu_custom_call.1} parent=5 // pred_fallthru
        _
      %p481 = scmp.le.s32.totalorder 2, %s18
      // Predicated region
      $region53: #{tpu_custom_call.1} parent=5 // pred_check
        %p482 = pneg %p481
      $region54: #{tpu_custom_call.1} parent=5 // pred_check_branch
        %484 = sbr.rel (%p482) target = $region56
      $region55: #{tpu_custom_call.1} parent=5 // pred_region
        %s485 = ssub.s32 %s18, 2
        // Predicated region
        $region57: #{tpu_custom_call.1} parent=55 // pred_check
          %p486 = pneg %p214
        $region58: #{tpu_custom_call.1} parent=55 // pred_check_branch
          %488 = sbr.rel (%p486) target = $region60
        $region59: #{tpu_custom_call.1} parent=55 // pred_region
          %s489 = sand.u32 %s199, 1
          %s490 = scalar_lea.sflag [#allocation4], %s489
          %s491 = sand.u32 %s199, 1
          %s492 = smul.addr %s491, 16
          %s493 = scalar_lea.vmem [#allocation5], %s492
          %495 = dma.done %s490, 256
        $region60: #{tpu_custom_call.1} parent=55 // pred_fallthru
          _
      $region56: #{tpu_custom_call.1} parent=5 // pred_fallthru
        _
    $region6: #{tpu_custom_call.1} parent=1 // loop_footer
      %s22 = sadd.s32 1, %s18
    $region7: #{tpu_custom_call.1} parent=1 // loop_footer_branch
      %17 = sbr.rel target = $region3
    $region8: #{tpu_custom_call.1} parent=1 // loop_exit
      _
    %496 = vsyncpa [#allocation3], 1
    %s497 = scalar_lea.sflag [#allocation3], 1
    %498 = vsyncpa %s497, 1
    %499 = vsyncpa [#allocation4], 1
    %s500 = scalar_lea.sflag [#allocation4], 1
    %501 = vsyncpa %s500, 1

</llo_original>
